<compile_context>
chip_gen: v7x
topology: tpu7x:2x2x1
jax: 0.10.0
libtpu: 0.0.40
codegen_flags: <defaults>
</compile_context>

<pallas_src>
import math

import jax
import jax.numpy as jnp
from jax.experimental import pallas as pl
from jax.experimental.pallas import tpu as pltpu


def _linear_quantize_kernel(scale_ref, zp_ref, x_ref, o_ref):
    # Pure VPU elementwise path; scale/zp are (tile_n, 1) f32 columns that
    # lane-broadcast for free. jnp.round == torch.round (half-to-even).
    x = x_ref[...].astype(jnp.float32)
    o_ref[...] = jnp.round(scale_ref[...] * x - zp_ref[...]).astype(o_ref.dtype)


def _reflow_rows(x2, scale, zp, pack):
    """(n, d) -> (n*k, d//k) so the sublane dim packs to the dtype's native count.

    Each original row splits into k consecutive rows, so repeating the per-row
    scale/zp k times preserves exact numerics.
    """
    n, d = x2.shape
    if n % pack == 0:
        return x2, scale, zp
    k = pack // math.gcd(n, pack)
    if k > 1 and d % k == 0 and (d // k) >= 128:
        x2 = x2.reshape(n * k, d // k)
        scale = jnp.repeat(scale, k)
        zp = jnp.repeat(zp, k)
    return x2, scale, zp


def _pertensor_relayout(x2):
    """Per-tensor params: any reshape is numerically identical, so present a
    lane-dense (multiple-of-128 wide) slab to avoid masked vst.msk stores."""
    total = x2.size
    if total % 128 != 0:
        return x2   # cannot make it lane-dense without padding; Pallas masks
    width = 128
    while total % (width * 2) == 0 and width * 2 <= 16384:
        width *= 2
    return x2.reshape(total // width, width)


def _choose_tiles(n_rows, d, bytes_per_elem, pack, block_budget_bytes):
    # Columns first: lane-dense output slab + long HBM bursts.
    min_rows = min(n_rows, pack)
    max_cols = block_budget_bytes // max(1, min_rows * bytes_per_elem)
    if d <= max_cols:
        tile_d = d                                   # full extent (OK even if not %128)
    else:
        tile_d = max(128, (max_cols // 128) * 128)
    # Rows: spend remaining budget; multiple of `pack`; prefer width over height.
    if n_rows <= pack:
        tile_n = n_rows                              # small full extent
    else:
        max_rows = max(pack, block_budget_bytes // max(1, tile_d * bytes_per_elem))
        cap = 256 if tile_d >= 4096 else 512
        tile_n = min(max_rows, n_rows, cap)
        tile_n = max(pack, (tile_n // pack) * pack)  # Pallas pads partial last block
    return tile_n, tile_d


def linear_quantize(x, scale, zero_point, *,
                    block_budget_bytes=8 << 20, tile_d_override=None):
    """JAX/Pallas equivalent of LinearQuantizeModule.forward (inplace=False)."""
    orig_shape = x.shape
    if x.ndim == 4:
        n = x.shape[0]
        x2 = x.reshape(n, -1)
    elif x.ndim == 2:
        n = x.shape[0]
        x2 = x
    else:
        raise ValueError("Only 2D and 4D inputs supported (matches the module).")

    # Affine params in f32 regardless of x dtype (torch: scale is f32).
    scale_v = jnp.asarray(scale, dtype=jnp.float32).reshape(-1)
    zp_v = jnp.asarray(zero_point, dtype=jnp.float32).reshape(-1)
    per_tensor = (scale_v.shape[0] == 1 and zp_v.shape[0] == 1)

    # torch promotion: f32 scale * bf16 input -> f32 result.
    out_dtype = jnp.promote_types(x2.dtype, jnp.float32)

    itemsize_in = jnp.dtype(x2.dtype).itemsize
    pack = max(8, 32 // itemsize_in)     # 8 rows f32, 16 bf16, 32 int8/fp8

    if per_tensor:
        d0 = x2.shape[1]
        if d0 < 128 or d0 % 128 != 0:
            x2 = _pertensor_relayout(x2)
        n_rows = x2.shape[0]
        scale_v = jnp.broadcast_to(scale_v, (n_rows,))
        zp_v = jnp.broadcast_to(zp_v, (n_rows,))
    else:
        if scale_v.shape[0] == 1 and n != 1:
            scale_v = jnp.broadcast_to(scale_v, (n,))
        if zp_v.shape[0] == 1 and n != 1:
            zp_v = jnp.broadcast_to(zp_v, (n,))
        # Sublane packing fix-up for small / odd N (perf-only, exact numerics).
        x2, scale_v, zp_v = _reflow_rows(x2, scale_v, zp_v, pack)
        # TODO(synk): per-row params with flattened width < 128 keep masked
        # partial stores; a lane-dense relayout there needs per-lane scale.

    n_rows, d = x2.shape
    bytes_per_elem = itemsize_in + jnp.dtype(out_dtype).itemsize
    tile_n, tile_d = _choose_tiles(n_rows, d, bytes_per_elem, pack,
                                   block_budget_bytes)
    if tile_d_override is not None:
        td = min(tile_d_override, d)
        tile_d = td if td == d else max(128, (td // 128) * 128)

    # Guarantee >= 2 blocks on one parallel axis when possible so both v7x
    # TensorCores get work (free ~2x on single-block tensors).
    if pl.cdiv(n_rows, tile_n) == 1 and pl.cdiv(d, tile_d) == 1:
        if n_rows >= 2 * pack:
            tile_n = max(pack, ((n_rows // 2 + pack - 1) // pack) * pack)
        elif d >= 256:
            tile_d = max(128, ((d // 2 + 127) // 128) * 128)

    scale2 = scale_v.reshape(n_rows, 1)
    zp2 = zp_v.reshape(n_rows, 1)
    grid = (pl.cdiv(n_rows, tile_n), pl.cdiv(d, tile_d))

    out = pl.pallas_call(
        _linear_quantize_kernel,
        out_shape=jax.ShapeDtypeStruct((n_rows, d), out_dtype),
        grid_spec=pltpu.PrefetchScalarGridSpec(
            num_scalar_prefetch=0,
            grid=grid,
            in_specs=[
                # scale/zp block index (i, 0) is constant across the inner j
                # axis, so the tiny buffer stays resident and is only re-DMA'd
                # when the row block changes.
                pl.BlockSpec((tile_n, 1), lambda i, j: (i, 0)),       # scale
                pl.BlockSpec((tile_n, 1), lambda i, j: (i, 0)),       # zero_point
                pl.BlockSpec((tile_n, tile_d), lambda i, j: (i, j)),  # x tile
            ],
            out_specs=pl.BlockSpec((tile_n, tile_d), lambda i, j: (i, j)),
        ),
        compiler_params=pltpu.CompilerParams(
            dimension_semantics=("parallel", "parallel"),
            # 2 streams x 2 buffers x ~8 MiB (in+out) blocks ~= 32 MiB plus
            # resident scale/zp. 48 MiB fits v5e/v6e (128 MiB) and v7x (64 MiB
            # physical); the explicit override is required on v5e (16 MiB
            # scoped default).
            vmem_limit_bytes=48 << 20,
        ),
    )(scale2, zp2, x2)
    return out.reshape(orig_shape)

# TODO(synk): the `inplace=True` branch of the torch module has no functional
# JAX equivalent; this kernel always returns a new array (inplace=False path).
# input_output_aliases could donate x's buffer if callers need that behavior.


if __name__ == "__main__":
    key = jax.random.PRNGKey(0)
    kx, ks, kz = jax.random.split(key, 3)

    def ref_fn(x, s, z):
        # torch semantics: promote to f32, round, return f32.
        s = jnp.asarray(s, jnp.float32)
        z = jnp.asarray(z, jnp.float32)
        if x.ndim == 4:
            s = s.reshape(-1, 1, 1, 1)
            z = z.reshape(-1, 1, 1, 1)
        else:
            s = s.reshape(-1, 1)
            z = z.reshape(-1, 1)
        return jnp.round(s * x.astype(jnp.float32) - z)

    # 1) 4D NCHW, N=2 — sublane reflow ((2,1024) -> (8,256)) + 2-block column split.
    x = jax.random.normal(kx, (2, 4, 16, 16), dtype=jnp.float32) * 3.0
    s = jax.random.uniform(ks, (2,), jnp.float32, minval=1.0, maxval=8.0)
    z = jax.random.uniform(kz, (2,), jnp.float32, minval=-4.0, maxval=4.0)
    out = jax.block_until_ready(linear_quantize(x, s, z))
    assert out.shape == x.shape and out.dtype == jnp.float32
    assert jnp.array_equal(out, ref_fn(x, s, z)), "4D mismatch vs reference"

    # 2) 2D, rows already a multiple of 8.
    x2 = jax.random.normal(kx, (8, 128), jnp.float32) * 2.5
    s2 = jax.random.uniform(ks, (8,), jnp.float32, minval=0.5, maxval=4.0)
    z2 = jax.random.uniform(kz, (8,), jnp.float32, minval=-2.0, maxval=2.0)
    out2 = jax.block_until_ready(linear_quantize(x2, s2, z2))
    assert jnp.array_equal(out2, ref_fn(x2, s2, z2)), "2D mismatch vs reference"

    # 3) Non-multiple-of-128 width + forced small column tile: partial-tile
    #    padding path and a multi-step grid.
    x3 = jax.random.normal(kx, (16, 1000), jnp.float32) * 1.7
    s3 = jax.random.uniform(ks, (16,), jnp.float32, minval=0.5, maxval=4.0)
    z3 = jax.random.uniform(kz, (16,), jnp.float32, minval=-2.0, maxval=2.0)
    out3 = jax.block_until_ready(linear_quantize(x3, s3, z3, tile_d_override=128))
    assert jnp.array_equal(out3, ref_fn(x3, s3, z3)), "partial-tile mismatch"

    # 4) bf16 input: f32 affine math, f32 output (torch promotion), odd rows.
    x4 = (jax.random.normal(kx, (5, 4, 8, 8), jnp.float32) * 3.0).astype(jnp.bfloat16)
    s4 = jax.random.uniform(ks, (5,), jnp.float32, minval=1.0, maxval=8.0)
    z4 = jax.random.uniform(kz, (5,), jnp.float32, minval=-4.0, maxval=4.0)
    out4 = jax.block_until_ready(linear_quantize(x4, s4, z4))
    assert out4.dtype == jnp.float32
    assert jnp.array_equal(out4, ref_fn(x4, s4, z4)), "bf16 mismatch vs reference"

    # 5) Per-tensor (scalar) scale / zero_point.
    out5 = jax.block_until_ready(
        linear_quantize(x2, jnp.float32(2.5), jnp.float32(0.75)))
    assert jnp.array_equal(out5, ref_fn(x2, jnp.float32(2.5), jnp.float32(0.75))), \
        "scalar-param mismatch vs reference"

    # 6) Per-tensor params with skinny width (d=96 < 128): lane-dense relayout
    #    ((4,96) -> (3,128)).
    x6 = jax.random.normal(kx, (4, 96), jnp.float32) * 2.0
    out6 = jax.block_until_ready(
        linear_quantize(x6, jnp.float32(3.0), jnp.float32(-1.25)))
    assert out6.shape == x6.shape
    assert jnp.array_equal(out6, ref_fn(x6, jnp.float32(3.0), jnp.float32(-1.25))), \
        "skinny per-tensor mismatch vs reference"

    print("KERNEL_OK")
</pallas_src>

<mosaic_0001>
module attributes {stable_mosaic.version = 11 : i64} {
  func.func @_linear_quantize_kernel(%arg0: i32, %arg1: i32, %arg2: memref<8x1xf32, #tpu.memory_space<vmem>>, %arg3: memref<8x1xf32, #tpu.memory_space<vmem>>, %arg4: memref<8x128xf32, #tpu.memory_space<vmem>>, %arg5: memref<8x128xf32, #tpu.memory_space<vmem>>) attributes {dimension_semantics = [#tpu.dimension_semantics<parallel>, #tpu.dimension_semantics<parallel>], iteration_bounds = array<i64: 1, 2>, scalar_prefetch = 0 : i64, scratch_operands = 0 : i64, tpu.core_type = #tpu.core_type<tc>, window_params = [{transform_indices = @transform_0, window_bounds = array<i64: 8, 1>}, {transform_indices = @transform_1, window_bounds = array<i64: 8, 1>}, {transform_indices = @transform_2, window_bounds = array<i64: 8, 128>}, {transform_indices = @transform_3, window_bounds = array<i64: 8, 128>}]} {
    %c0 = arith.constant 0 : index
    %c0_0 = arith.constant 0 : index
    %0 = vector.load %arg4[%c0, %c0_0] : memref<8x128xf32, #tpu.memory_space<vmem>>, vector<8x128xf32>
    %c0_1 = arith.constant 0 : index
    %c0_2 = arith.constant 0 : index
    %1 = vector.load %arg2[%c0_1, %c0_2] : memref<8x1xf32, #tpu.memory_space<vmem>>, vector<8x1xf32>
    %2 = vector.broadcast %1 : vector<8x1xf32> to vector<8x128xf32>
    %3 = arith.mulf %2, %0 : vector<8x128xf32>
    %c0_3 = arith.constant 0 : index
    %c0_4 = arith.constant 0 : index
    %4 = vector.load %arg3[%c0_3, %c0_4] : memref<8x1xf32, #tpu.memory_space<vmem>>, vector<8x1xf32>
    %5 = vector.broadcast %4 : vector<8x1xf32> to vector<8x128xf32>
    %6 = arith.subf %3, %5 : vector<8x128xf32>
    %7 = math.roundeven %6 : vector<8x128xf32>
    %c0_5 = arith.constant 0 : index
    %c0_6 = arith.constant 0 : index
    %8 = vector.load %arg5[%c0_5, %c0_6] : memref<8x128xf32, #tpu.memory_space<vmem>>, vector<8x128xf32>
    tpu.vector_store %arg5[%c0_5, %c0_6], %7 {strides = array<i32>} : memref<8x128xf32, #tpu.memory_space<vmem>>, vector<8x128xf32>,
    return
  }
  func.func @transform_0(%arg0: i32, %arg1: i32) -> (i32, i32) {
    %c0_i32 = arith.constant 0 : i32
    %c0_i32_0 = arith.constant 0 : i32
    return %arg0, %c0_i32 : i32, i32
  }
  func.func @transform_1(%arg0: i32, %arg1: i32) -> (i32, i32) {
    %c0_i32 = arith.constant 0 : i32
    %c0_i32_0 = arith.constant 0 : i32
    return %arg0, %c0_i32 : i32, i32
  }
  func.func @transform_2(%arg0: i32, %arg1: i32) -> (i32, i32) {
    %c0_i32 = arith.constant 0 : i32
    return %arg0, %arg1 : i32, i32
  }
  func.func @transform_3(%arg0: i32, %arg1: i32) -> (i32, i32) {
    %c0_i32 = arith.constant 0 : i32
    return %arg0, %arg1 : i32, i32
  }
}

</mosaic_0001>

<llo_original>
// kernel: tpu_custom_call.1
$region0: #{tpu_custom_call.1}
  #allocation0 [shape = 'u32[]', space=smem, size = 0x4, offset = 0x4, fixed_abs, tag = 'smem constant byte address 0x4 - core index']
  #allocation1 [shape = 'u32[144,128]{1,0:T(1,128)}', space=vmem, size = 0x12000, scoped, tag = 'internal scratch']
  %s0 = inlined_call_operand.vmem [shape: f32[8,1], index: 0, kind: input, shape index: {}]
  %s1 = inlined_call_operand.vmem [shape: f32[8,1], index: 1, kind: input, shape index: {}]
  %s2 = inlined_call_operand.vmem [shape: f32[8,256], index: 2, kind: input, shape index: {}]
  %s3 = inlined_call_operand.hbm [shape: f32[8,256], index: 3, kind: output, shape index: {}]
  %s4 = sld [smem:[#allocation0]]
  $region45: #{tpu_custom_call.1} parent=0
    _
  %s6 = ssub.s32 1, %s4
  %s7 = scalar_select 0, %s6, %s4
  $region1: #{tpu_custom_call.1} parent=0
    #allocation2 [shape = 'u8[8192]{0}', space=vmem, size = 0x2000, scoped, tag = 'output window, operand 0']
    #allocation3 [shape = 's32[2]{0}', space=sflag, size = 0x8, scoped, tag = 'scoped memory for tpu_custom_call.1']
    %8 = vsyncpa [#allocation3], 0
    %s9 = scalar_lea.sflag [#allocation3], 1
    %10 = vsyncpa %s9, 0
    loop: start=0, step=1, limit=4
    $region2: #{tpu_custom_call.1} parent=1 // loop_pre_header
      _
    $region3: #{tpu_custom_call.1} parent=1 // loop_header
      %s12 = sphi 0, %s16
      %p13 = scmp.ge.s32.totalorder %s12, 4
      %s19 = sphi 0, %s31
      %s20 = sphi 0, %s27
      %s21 = sphi 0, %s19
      %s22 = sphi 0, %s20
      %s23 = sphi 0, %s21
      %s24 = sphi 0, %s22
      %s34 = sphi 0, %s36
      %s37 = sphi 0, %s34
      %s38 = sphi 0, %s37
      %s54 = sphi 0, %s38
      %s60 = sphi 0, %s62
      %s63 = sphi 0, %s60
      %s64 = sphi 0, %s63
      %s80 = sphi 0, %s64
      %s88 = sphi 0, %s90
      %s91 = sphi 0, %s88
      %s92 = sphi 0, %s91
      %s108 = sphi 0, %s92
      %s116 = sphi 0, %s118
      %s119 = sphi 0, %s116
      %s120 = sphi 0, %s119
      %s136 = sphi 0, %s120
    $region4: #{tpu_custom_call.1} parent=1 // loop_header_branch
      %15 = sbr.rel (%p13) target = $region8
    $region5: #{tpu_custom_call.1} parent=1 // loop_body
      %s17 = ssub.s32 %s12, 1
      %s18 = ssub.s32 %s12, 2
      %s25 = sadd.s32 1, %s20
      %p26 = scmp.ge.s32.totalorder %s25, 2
      %s27 = scalar_select %p26, 0, %s25
      %s28 = sadd.s32 1, %s19
      %s29 = scalar_select %p26, %s28, %s19
      %p30 = scmp.ge.s32.totalorder %s29, 1
      %s31 = scalar_select %p30, 0, %s29
      %s32 = ssub.s32 %s19, %s31
      %p33 = scmp.eq.s32.totalorder %s32, 0
      %s35 = sadd.s32 %s34, 1
      %s36 = scalar_select %p33, %s34, %s35
      %p39 = pneg %p33
      %p40 = scmp.eq.s32.totalorder %s12, 1
      %p41 = por %p39, %p40
      %p42 = scmp.ne.s32.totalorder %s34, %s37
      %p43 = scmp.eq.s32.totalorder %s12, 0
      %p44 = por %p42, %p43
      %p45 = scmp.ne.s32.totalorder %s34, %s37
      %p46 = scmp.eq.s32.totalorder %s17, 1
      %p47 = por %p45, %p46
      %p48 = scmp.ne.s32.totalorder %s37, %s38
      %p49 = scmp.eq.s32.totalorder %s17, 0
      %p50 = por %p48, %p49
      %p51 = scmp.ne.s32.totalorder %s37, %s38
      %p52 = scmp.eq.s32.totalorder %s18, 1
      %p53 = por %p51, %p52
      %p55 = scmp.ne.s32.totalorder %s38, %s54
      %p56 = scmp.eq.s32.totalorder %s18, 0
      %p57 = por %p55, %p56
      %s58 = ssub.s32 %s19, %s31
      %p59 = scmp.eq.s32.totalorder %s58, 0
      %s61 = sadd.s32 %s60, 1
      %s62 = scalar_select %p59, %s60, %s61
      %p65 = pneg %p59
      %p66 = scmp.eq.s32.totalorder %s12, 1
      %p67 = por %p65, %p66
      %p68 = scmp.ne.s32.totalorder %s60, %s63
      %p69 = scmp.eq.s32.totalorder %s12, 0
      %p70 = por %p68, %p69
      %p71 = scmp.ne.s32.totalorder %s60, %s63
      %p72 = scmp.eq.s32.totalorder %s17, 1
      %p73 = por %p71, %p72
      %p74 = scmp.ne.s32.totalorder %s63, %s64
      %p75 = scmp.eq.s32.totalorder %s17, 0
      %p76 = por %p74, %p75
      %p77 = scmp.ne.s32.totalorder %s63, %s64
      %p78 = scmp.eq.s32.totalorder %s18, 1
      %p79 = por %p77, %p78
      %p81 = scmp.ne.s32.totalorder %s64, %s80
      %p82 = scmp.eq.s32.totalorder %s18, 0
      %p83 = por %p81, %p82
      %s84 = ssub.s32 %s19, %s31
      %s85 = ssub.s32 %s20, %s27
      %s86 = sor.u32 %s84, %s85
      %p87 = scmp.eq.s32.totalorder %s86, 0
      %s89 = sadd.s32 %s88, 1
      %s90 = scalar_select %p87, %s88, %s89
      %p93 = pneg %p87
      %p94 = scmp.eq.s32.totalorder %s12, 1
      %p95 = por %p93, %p94
      %p96 = scmp.ne.s32.totalorder %s88, %s91
      %p97 = scmp.eq.s32.totalorder %s12, 0
      %p98 = por %p96, %p97
      %p99 = scmp.ne.s32.totalorder %s88, %s91
      %p100 = scmp.eq.s32.totalorder %s17, 1
      %p101 = por %p99, %p100
      %p102 = scmp.ne.s32.totalorder %s91, %s92
      %p103 = scmp.eq.s32.totalorder %s17, 0
      %p104 = por %p102, %p103
      %p105 = scmp.ne.s32.totalorder %s91, %s92
      %p106 = scmp.eq.s32.totalorder %s18, 1
      %p107 = por %p105, %p106
      %p109 = scmp.ne.s32.totalorder %s92, %s108
      %p110 = scmp.eq.s32.totalorder %s18, 0
      %p111 = por %p109, %p110
      %s112 = ssub.s32 %s19, %s31
      %s113 = ssub.s32 %s20, %s27
      %s114 = sor.u32 %s112, %s113
      %p115 = scmp.eq.s32.totalorder %s114, 0
      %s117 = sadd.s32 %s116, 1
      %s118 = scalar_select %p115, %s116, %s117
      %p121 = pneg %p115
      %p122 = scmp.eq.s32.totalorder %s12, 1
      %p123 = por %p121, %p122
      %p124 = scmp.ne.s32.totalorder %s116, %s119
      %p125 = scmp.eq.s32.totalorder %s12, 0
      %p126 = por %p124, %p125
      %p127 = scmp.ne.s32.totalorder %s116, %s119
      %p128 = scmp.eq.s32.totalorder %s17, 1
      %p129 = por %p127, %p128
      %p130 = scmp.ne.s32.totalorder %s119, %s120
      %p131 = scmp.eq.s32.totalorder %s17, 0
      %p132 = por %p130, %p131
      %p133 = scmp.ne.s32.totalorder %s119, %s120
      %p134 = scmp.eq.s32.totalorder %s18, 1
      %p135 = por %p133, %p134
      %p137 = scmp.ne.s32.totalorder %s120, %s136
      %p138 = scmp.eq.s32.totalorder %s18, 0
      %p139 = por %p137, %p138
      %p140 = scmp.le.s32.totalorder 1, %s12
      %p141 = scmp.lt.s32.totalorder %s12, 3
      %p142 = pnand %p140, %p141
      %p143 = pneg %p142
      // Predicated region
      $region9: #{tpu_custom_call.1} parent=5 // pred_check
        _
      $region10: #{tpu_custom_call.1} parent=5 // pred_check_branch
        %145 = sbr.rel (%p142) target = $region12
      $region11: #{tpu_custom_call.1} parent=5 // pred_region
        %s146 = ssub.s32 %s12, 1
        // Predicated region
        $region13: #{tpu_custom_call.1} parent=11 // pred_check
          %p147 = pneg %p50
        $region14: #{tpu_custom_call.1} parent=11 // pred_check_branch
          %149 = sbr.rel (%p147) target = $region16
        $region15: #{tpu_custom_call.1} parent=11 // pred_region
          %p150 = scmp.lt.s32.totalorder %s21, 0
          %s151 = scalar_select %p150, %s21, 0
          %s152 = smul.addr %s151, 8
          %s153 = scalar_lea.vmem %s0, %s152
        $region16: #{tpu_custom_call.1} parent=11 // pred_fallthru
          _
        // Predicated region
        $region17: #{tpu_custom_call.1} parent=11 // pred_check
          %p154 = pneg %p76
        $region18: #{tpu_custom_call.1} parent=11 // pred_check_branch
          %156 = sbr.rel (%p154) target = $region20
        $region19: #{tpu_custom_call.1} parent=11 // pred_region
          %p157 = scmp.lt.s32.totalorder %s21, 0
          %s158 = scalar_select %p157, %s21, 0
          %s159 = smul.addr %s158, 8
          %s160 = scalar_lea.vmem %s1, %s159
        $region20: #{tpu_custom_call.1} parent=11 // pred_fallthru
          _
      $region12: #{tpu_custom_call.1} parent=5 // pred_fallthru
        _
      %p161 = scmp.lt.s32.totalorder %s12, 2
      // Predicated region
      $region21: #{tpu_custom_call.1} parent=5 // pred_check
        %p162 = pneg %p161
      $region22: #{tpu_custom_call.1} parent=5 // pred_check_branch
        %164 = sbr.rel (%p162) target = $region24
      $region23: #{tpu_custom_call.1} parent=5 // pred_region
        // Predicated region
        $region25: #{tpu_custom_call.1} parent=23 // pred_check
          %p165 = pneg %p98
        $region26: #{tpu_custom_call.1} parent=23 // pred_check_branch
          %167 = sbr.rel (%p165) target = $region28
        $region27: #{tpu_custom_call.1} parent=23 // pred_region
          %p168 = scmp.lt.s32.totalorder %s19, 0
          %s169 = scalar_select %p168, %s19, 0
          %p170 = scmp.lt.s32.totalorder %s20, 1
          %s171 = scalar_select %p170, %s20, 1
          %s172 = smul.addr %s169, 2
          %s173 = sadd.s32 %s171, %s172
          %s174 = smul.addr %s173, 8
          %s175 = scalar_lea.vmem %s2, %s174
        $region28: #{tpu_custom_call.1} parent=23 // pred_fallthru
          _
      $region24: #{tpu_custom_call.1} parent=5 // pred_fallthru
        _
      %p176 = scmp.le.s32.totalorder 1, %s12
      %p177 = scmp.lt.s32.totalorder %s12, 3
      %p178 = pnand %p176, %p177
      %p179 = pneg %p178
      // Predicated region
      $region29: #{tpu_custom_call.1} parent=5 // pred_check
        _
      $region30: #{tpu_custom_call.1} parent=5 // pred_check_branch
        %181 = sbr.rel (%p178) target = $region32
      $region31: #{tpu_custom_call.1} parent=5 // pred_region
        %s182 = ssub.s32 %s12, 1
        %p183 = scmp.lt.s32.totalorder %s21, 0
        %s184 = scalar_select %p183, %s21, 0
        %s185 = smul.addr %s184, 8
        %s186 = scalar_lea.vmem %s0, %s185
        %p187 = pneg %p50
        %p188 = pneg %p47
        %p189 = scmp.lt.s32.totalorder %s21, 0
        %s190 = scalar_select %p189, %s21, 0
        %s191 = smul.addr %s190, 8
        %s192 = scalar_lea.vmem %s1, %s191
        %p193 = pneg %p76
        %p194 = pneg %p73
        %p195 = scmp.lt.s32.totalorder %s21, 0
        %s196 = scalar_select %p195, %s21, 0
        %p197 = scmp.lt.s32.totalorder %s22, 1
        %s198 = scalar_select %p197, %s22, 1
        %s199 = smul.addr %s196, 2
        %s200 = sadd.s32 %s198, %s199
        %s201 = smul.addr %s200, 8
        %s202 = scalar_lea.vmem %s2, %s201
        %p203 = pneg %p104
        %p204 = pneg %p101
        %p205 = pneg %p132
        %p206 = pneg %p129
        %s207 = sand.u32 %s119, 1
        %s208 = scalar_lea.sflag [#allocation3], %s207
        %s209 = sand.u32 %s119, 1
        %s210 = smul.addr %s209, 8
        %s211 = scalar_lea.vmem [#allocation2], %s210
        %p212 = scmp.lt.s32.totalorder %s21, 0
        %s213 = scalar_select %p212, %s21, 0
        %s214 = smul.addr %s213, 8
        %s215 = scalar_lea.vmem %s0, %s214
        %p216 = scmp.lt.s32.totalorder %s21, 0
        %s217 = scalar_select %p216, %s21, 0
        %s218 = smul.addr %s217, 8
        %s219 = scalar_lea.vmem %s1, %s218
        %p220 = scmp.lt.s32.totalorder %s21, 0
        %s221 = scalar_select %p220, %s21, 0
        %p222 = scmp.lt.s32.totalorder %s22, 1
        %s223 = scalar_select %p222, %s22, 1
        %s224 = smul.addr %s221, 2
        %s225 = sadd.s32 %s223, %s224
        %s226 = smul.addr %s225, 8
        %s227 = scalar_lea.vmem %s2, %s226
        %v228 = vld [vmem:[%s227] sm:$0xff]
        %v229 = vld [vmem:[%s215] sm:$0xff]
        %231 = vset.pattern.permute.xlu0 0
        %232 = vperm.xlu0 %231, %v229
        %v233 = vpop.permute.xlu0 %232
        %v235 = vmul.f32 %v233, %v228
        %v236 = vld [vmem:[%s219] sm:$0xff]
        %238 = vset.pattern.permute.xlu0 0
        %239 = vperm.xlu0 %238, %v236
        %v240 = vpop.permute.xlu0 %239
        %v242 = vsub.f32 %v235, %v240
        %v243 = vround.ne.pseudo %v242
        %244 = vst [vmem:[%s211] sm:$0xff] %v243
        %s245 = sand.u32 %s119, 1
        %s246 = scalar_lea.sflag [#allocation3], %s245
        %s247 = sand.u32 %s119, 1
        %s248 = smul.addr %s247, 8
        %s249 = scalar_lea.vmem [#allocation2], %s248
        // Predicated region
        $region33: #{tpu_custom_call.1} parent=31 // pred_check
          %p250 = pneg %p129
        $region34: #{tpu_custom_call.1} parent=31 // pred_check_branch
          %252 = sbr.rel (%p250) target = $region36
        $region35: #{tpu_custom_call.1} parent=31 // pred_region
          %s254 = ssub.s32 128, 128
          %255 = vsyncadd %s246, %s254
          %s256 = smul.addr %s21, 2
          %s257 = sadd.s32 %s22, %s256
          %s258 = smul.addr %s257, 128
          %s259 = scalar_lea.hbm %s3, %s258
          %s261 = sshll.u32 %s249, 4
          %s262 = int_to_ptr.vmem [resolvable:$true] %s261
          %264 = dma.vmem_to_hbm [thread:$0]  %s262, 128, %s259, %s246
        $region36: #{tpu_custom_call.1} parent=31 // pred_fallthru
          _
      $region32: #{tpu_custom_call.1} parent=5 // pred_fallthru
        _
      %p265 = scmp.le.s32.totalorder 2, %s12
      // Predicated region
      $region37: #{tpu_custom_call.1} parent=5 // pred_check
        %p266 = pneg %p265
      $region38: #{tpu_custom_call.1} parent=5 // pred_check_branch
        %268 = sbr.rel (%p266) target = $region40
      $region39: #{tpu_custom_call.1} parent=5 // pred_region
        %s269 = ssub.s32 %s12, 2
        // Predicated region
        $region41: #{tpu_custom_call.1} parent=39 // pred_check
          %p270 = pneg %p135
        $region42: #{tpu_custom_call.1} parent=39 // pred_check_branch
          %272 = sbr.rel (%p270) target = $region44
        $region43: #{tpu_custom_call.1} parent=39 // pred_region
          %s273 = sand.u32 %s120, 1
          %s274 = scalar_lea.sflag [#allocation3], %s273
          %s275 = sand.u32 %s120, 1
          %s276 = smul.addr %s275, 8
          %s277 = scalar_lea.vmem [#allocation2], %s276
          %278 = dma.done %s274, 128
        $region44: #{tpu_custom_call.1} parent=39 // pred_fallthru
          _
      $region40: #{tpu_custom_call.1} parent=5 // pred_fallthru
        _
    $region6: #{tpu_custom_call.1} parent=1 // loop_footer
      %s16 = sadd.s32 1, %s12
    $region7: #{tpu_custom_call.1} parent=1 // loop_footer_branch
      %11 = sbr.rel target = $region3
    $region8: #{tpu_custom_call.1} parent=1 // loop_exit
      _
    %279 = vsyncpa [#allocation3], 1
    %s280 = scalar_lea.sflag [#allocation3], 1
    %281 = vsyncpa %s280, 1

</llo_original>
